<compile_context>
chip_gen: v7x
topology: tpu7x:2x2x1
jax: 0.10.0
libtpu: 0.0.40
codegen_flags: <defaults>
</compile_context>

<pallas_src>
import functools

import jax
import jax.numpy as jnp
from jax import lax
from jax.experimental import pallas as pl
from jax.experimental.pallas import tpu as pltpu


def _round_up(n, m):
    return ((n + m - 1) // m) * m


def _cdiv(a, b):
    return (a + b - 1) // b


def classification_kernel(x_ref, w1_ref, b1_ref, wh_ref, bh_ref, y_ref, *, c1, c2):
    # feature_extractor: Linear (bf16 MXU inputs, f32 accumulate) + bias + ReLU.
    h = jnp.dot(x_ref[...], w1_ref[...], preferred_element_type=jnp.float32)
    h = jnp.maximum(h + b1_ref[...], 0.0)                        # (TB, D_hid_p) f32

    # Fused heads: one (TB, D_hid_p) x (D_hid_p, C_pad) bf16 matmul, lane-dense.
    logits = jnp.dot(h.astype(wh_ref.dtype), wh_ref[...],
                     preferred_element_type=jnp.float32)
    logits = logits + bh_ref[...]                                # (TB, C_pad) f32

    lane = lax.broadcasted_iota(jnp.int32, logits.shape, 1)
    mask1 = lane < c1
    mask2 = (lane >= c1) & (lane < c1 + c2)
    valid = lane < c1 + c2

    # Fused dual softmax: single exp pass over the whole (TB, C_pad) block.
    neg_inf = jnp.full_like(logits, -jnp.inf)
    m1 = jnp.max(jnp.where(mask1, logits, neg_inf), axis=-1, keepdims=True)
    m2 = jnp.max(jnp.where(mask2, logits, neg_inf), axis=-1, keepdims=True)
    shift = jnp.where(mask1, m1, m2)           # each lane shifted by its head's max
    e = jnp.exp(logits - shift)
    e = jnp.where(valid, e, 0.0)               # zero padded class lanes
    s1 = jnp.sum(jnp.where(mask1, e, 0.0), axis=-1, keepdims=True)
    s2 = jnp.sum(jnp.where(mask2, e, 0.0), axis=-1, keepdims=True)
    # Exact reciprocal: only TB scalars per head, essentially free, and keeps
    # each softmax row summing to 1 to f32 precision.
    inv = jnp.where(mask1, 1.0 / s1, 1.0 / s2)
    y_ref[...] = e * inv                       # disjoint heads -> one dense store


def prepare_params(w1, b1, wh1, bh1, wh2, bh2):
    """One-time weight preparation (call at model init, NOT per forward).

    Fuses the two head weights, zero-pads D_in / D_hid / class axes to
    multiples of 128, and casts the matmul operands to bfloat16 (biases stay
    f32 and are added after the f32-accumulated matmuls).
    """
    d_in, d_hid = w1.shape
    c1, c2 = wh1.shape[1], wh2.shape[1]
    d_in_p = _round_up(d_in, 128)
    d_hid_p = _round_up(d_hid, 128)
    c_pad = _round_up(c1 + c2, 128)

    f32, bf16 = jnp.float32, jnp.bfloat16
    w1p = jnp.pad(w1.astype(f32),
                  ((0, d_in_p - d_in), (0, d_hid_p - d_hid))).astype(bf16)
    b1p = jnp.pad(b1.reshape(1, -1).astype(f32), ((0, 0), (0, d_hid_p - d_hid)))
    wh = jnp.concatenate([wh1, wh2], axis=1).astype(f32)
    bh = jnp.concatenate([bh1.reshape(1, -1), bh2.reshape(1, -1)], axis=1).astype(f32)
    whp = jnp.pad(wh, ((0, d_hid_p - d_hid), (0, c_pad - (c1 + c2)))).astype(bf16)
    bhp = jnp.pad(bh, ((0, 0), (0, c_pad - (c1 + c2))))

    meta = dict(c1=c1, c2=c2, d_in=d_in, d_in_p=d_in_p,
                d_hid_p=d_hid_p, c_pad=c_pad)
    return (w1p, b1p, whp, bhp, meta)


def classification_model(x, prepared, *, tb=512):
    """x: (B, D_in) float; prepared: output of prepare_params()."""
    w1p, b1p, whp, bhp, meta = prepared
    c1, c2 = meta["c1"], meta["c2"]
    d_in, d_in_p = meta["d_in"], meta["d_in_p"]
    d_hid_p, c_pad = meta["d_hid_p"], meta["c_pad"]

    B = x.shape[0]
    # Batch tile: large (amortizes ~0.35 us per grid step), multiple of 16 (bf16
    # sublane packing), but capped at ceil(B/2) so the grid has >= 2 "parallel"
    # steps and both of v7x's TensorCores get work.
    TB = max(16, min(_round_up(tb, 16), _round_up(_cdiv(B, 2), 16)))
    b_pad = _round_up(B, TB)

    xp = x.astype(jnp.bfloat16)
    if b_pad != B or d_in_p != d_in:
        # Only materialize a padded copy when actually required.
        xp = jnp.pad(xp, ((0, b_pad - B), (0, d_in_p - d_in)))

    grid = (b_pad // TB,)
    kernel = functools.partial(classification_kernel, c1=c1, c2=c2)

    cost = pl.CostEstimate(
        flops=2 * b_pad * (d_in_p * d_hid_p + d_hid_p * c_pad),
        transcendentals=b_pad * c_pad,
        bytes_accessed=(2 * (b_pad * d_in_p + d_in_p * d_hid_p + d_hid_p * c_pad)
                        + 4 * (d_hid_p + c_pad + b_pad * c_pad)),
    )

    y = pl.pallas_call(
        kernel,
        out_shape=jax.ShapeDtypeStruct((b_pad, c_pad), jnp.float32),
        grid_spec=pltpu.PrefetchScalarGridSpec(
            num_scalar_prefetch=0,
            grid=grid,
            in_specs=[
                pl.BlockSpec((TB, d_in_p), lambda i: (i, 0)),       # x tile (bf16)
                pl.BlockSpec((d_in_p, d_hid_p), lambda i: (0, 0)),  # w1 (resident)
                pl.BlockSpec((1, d_hid_p), lambda i: (0, 0)),       # b1 (f32)
                pl.BlockSpec((d_hid_p, c_pad), lambda i: (0, 0)),   # fused head W
                pl.BlockSpec((1, c_pad), lambda i: (0, 0)),         # fused head b
            ],
            out_specs=pl.BlockSpec((TB, c_pad), lambda i: (i, 0)),  # lane-dense slab
        ),
        compiler_params=pltpu.CompilerParams(
            dimension_semantics=("parallel",)),
        cost_estimate=cost,
    )(xp, w1p, b1p, whp, bhp)

    # Slice the two heads (and drop any batch padding) on the wrapper side.
    return y[:B, :c1], y[:B, c1:c1 + c2]


def reference(x, w1, b1, wh1, bh1, wh2, bh2):
    hp = jax.lax.Precision.HIGHEST
    h = jnp.maximum(jnp.dot(x, w1, precision=hp) + b1, 0.0)
    y1 = jax.nn.softmax(jnp.dot(h, wh1, precision=hp) + bh1, axis=-1)
    y2 = jax.nn.softmax(jnp.dot(h, wh2, precision=hp) + bh2, axis=-1)
    return y1, y2


if __name__ == "__main__":
    # Module defaults: dim_input=128, dim_hidden=256, num_classes=(5, 7).
    # B=64 -> TB=32, grid=(2,) (exercises the pipelined grid / both v7x TCs).
    B, D_IN, D_HID = 64, 128, 256
    NUM_CLASSES = (5, 7)

    key = jax.random.PRNGKey(0)
    kx, kw1, kb1, kw2, kb2, kw3, kb3 = jax.random.split(key, 7)

    x = jax.random.normal(kx, (B, D_IN), dtype=jnp.float32)

    # nn.Linear-equivalent params, stored transposed as (in, out); biases 1-D.
    w1 = jax.random.normal(kw1, (D_IN, D_HID), dtype=jnp.float32) * 0.1
    b1 = jax.random.normal(kb1, (D_HID,), dtype=jnp.float32) * 0.1
    wh1 = jax.random.normal(kw2, (D_HID, NUM_CLASSES[0]), dtype=jnp.float32) * 0.1
    bh1 = jax.random.normal(kb2, (NUM_CLASSES[0],), dtype=jnp.float32) * 0.1
    wh2 = jax.random.normal(kw3, (D_HID, NUM_CLASSES[1]), dtype=jnp.float32) * 0.1
    bh2 = jax.random.normal(kb3, (NUM_CLASSES[1],), dtype=jnp.float32) * 0.1

    prepared = prepare_params(w1, b1, wh1, bh1, wh2, bh2)   # one-time weight prep
    y1, y2 = classification_model(x, prepared)
    jax.block_until_ready((y1, y2))

    r1, r2 = reference(x, w1, b1, wh1, bh1, wh2, bh2)
    assert y1.shape == (B, NUM_CLASSES[0]) and y2.shape == (B, NUM_CLASSES[1])
    # bf16 MXU inputs with f32 accumulation vs. a HIGHEST-precision f32
    # reference: softmax outputs agree to a few 1e-3; tolerance covers that.
    assert jnp.allclose(y1, r1, atol=2e-2), "head1 mismatch"
    assert jnp.allclose(y2, r2, atol=2e-2), "head2 mismatch"
    # Exact reciprocal in the kernel -> each softmax row sums to 1 tightly.
    assert jnp.allclose(jnp.sum(y1, axis=-1), 1.0, atol=1e-5)
    assert jnp.allclose(jnp.sum(y2, axis=-1), 1.0, atol=1e-5)

    print("KERNEL_OK")
</pallas_src>

<mosaic_0001>
module attributes {stable_mosaic.version = 11 : i64} {
  func.func @classification_kernel(%arg0: i32, %arg1: memref<32x128xbf16, #tpu.memory_space<vmem>>, %arg2: memref<128x256xbf16, #tpu.memory_space<vmem>>, %arg3: memref<1x256xf32, #tpu.memory_space<vmem>>, %arg4: memref<256x128xbf16, #tpu.memory_space<vmem>>, %arg5: memref<1x128xf32, #tpu.memory_space<vmem>>, %arg6: memref<32x128xf32, #tpu.memory_space<vmem>>) attributes {dimension_semantics = [#tpu.dimension_semantics<parallel>], iteration_bounds = array<i64: 2>, scalar_prefetch = 0 : i64, scratch_operands = 0 : i64, tpu.core_type = #tpu.core_type<tc>, window_params = [{transform_indices = @transform_0, window_bounds = array<i64: 32, 128>}, {pipeline_mode = #tpu.pipeline_mode<synchronous>, transform_indices = @transform_1, window_bounds = array<i64: 128, 256>}, {pipeline_mode = #tpu.pipeline_mode<synchronous>, transform_indices = @transform_2, window_bounds = array<i64: 1, 256>}, {pipeline_mode = #tpu.pipeline_mode<synchronous>, transform_indices = @transform_3, window_bounds = array<i64: 256, 128>}, {pipeline_mode = #tpu.pipeline_mode<synchronous>, transform_indices = @transform_4, window_bounds = array<i64: 1, 128>}, {transform_indices = @transform_5, window_bounds = array<i64: 32, 128>}]} {
    %c0 = arith.constant 0 : index
    %c0_0 = arith.constant 0 : index
    %0 = vector.load %arg1[%c0, %c0_0] : memref<32x128xbf16, #tpu.memory_space<vmem>>, vector<32x128xbf16>
    %c0_1 = arith.constant 0 : index
    %c0_2 = arith.constant 0 : index
    %1 = vector.load %arg2[%c0_1, %c0_2] : memref<128x256xbf16, #tpu.memory_space<vmem>>, vector<128x256xbf16>
    %cst = arith.constant dense<0.000000e+00> : vector<32x256xf32>
    %2 = tpu.matmul %0, %1, %cst {dimension_numbers = #tpu.dot_dimension_numbers<[1], [0], [0], [1], [0, 0, 1, 1], [], []>} : vector<32x128xbf16>, vector<128x256xbf16>, vector<32x256xf32> -> vector<32x256xf32>
    %c0_3 = arith.constant 0 : index
    %c0_4 = arith.constant 0 : index
    %3 = vector.load %arg3[%c0_3, %c0_4] : memref<1x256xf32, #tpu.memory_space<vmem>>, vector<1x256xf32>
    %4 = vector.broadcast %3 : vector<1x256xf32> to vector<32x256xf32>
    %5 = arith.addf %2, %4 : vector<32x256xf32>
    %cst_5 = arith.constant 0.000000e+00 : f32
    %6 = vector.broadcast %cst_5 : f32 to vector<32x256xf32>
    %7 = arith.maximumf %5, %6 : vector<32x256xf32>
    %8 = arith.truncf %7 : vector<32x256xf32> to vector<32x256xbf16>
    %c0_6 = arith.constant 0 : index
    %c0_7 = arith.constant 0 : index
    %9 = vector.load %arg4[%c0_6, %c0_7] : memref<256x128xbf16, #tpu.memory_space<vmem>>, vector<256x128xbf16>
    %cst_8 = arith.constant dense<0.000000e+00> : vector<32x128xf32>
    %10 = tpu.matmul %8, %9, %cst_8 {dimension_numbers = #tpu.dot_dimension_numbers<[1], [0], [0], [1], [0, 0, 1, 1], [], []>} : vector<32x256xbf16>, vector<256x128xbf16>, vector<32x128xf32> -> vector<32x128xf32>
    %c0_9 = arith.constant 0 : index
    %c0_10 = arith.constant 0 : index
    %11 = vector.load %arg5[%c0_9, %c0_10] : memref<1x128xf32, #tpu.memory_space<vmem>>, vector<1x128xf32>
    %12 = vector.broadcast %11 : vector<1x128xf32> to vector<32x128xf32>
    %13 = arith.addf %10, %12 : vector<32x128xf32>
    %14 = tpu.iota {dimensions = array<i32: 1>} : vector<32x128xi32>
    %c5_i32 = arith.constant 5 : i32
    %15 = vector.broadcast %c5_i32 : i32 to vector<32x128xi32>
    %16 = arith.cmpi slt, %14, %15 : vector<32x128xi32>
    %c5_i32_11 = arith.constant 5 : i32
    %17 = vector.broadcast %c5_i32_11 : i32 to vector<32x128xi32>
    %18 = arith.cmpi sge, %14, %17 : vector<32x128xi32>
    %c12_i32 = arith.constant 12 : i32
    %19 = vector.broadcast %c12_i32 : i32 to vector<32x128xi32>
    %20 = arith.cmpi slt, %14, %19 : vector<32x128xi32>
    %21 = arith.andi %18, %20 : vector<32x128xi1>
    %c12_i32_12 = arith.constant 12 : i32
    %22 = vector.broadcast %c12_i32_12 : i32 to vector<32x128xi32>
    %23 = arith.cmpi slt, %14, %22 : vector<32x128xi32>
    %cst_13 = arith.constant 0xFF800000 : f32
    %24 = vector.broadcast %cst_13 : f32 to vector<32x128xf32>
    %25 = arith.select %16, %13, %24 : vector<32x128xi1>, vector<32x128xf32>
    %cst_14 = arith.constant dense<0xFF800000> : vector<32xf32>
    %26 = vector.multi_reduction <maximumf>, %25, %cst_14 [1] : vector<32x128xf32> to vector<32xf32>
    %27 = vector.shape_cast %26 : vector<32xf32> to vector<32x1xf32>
    %28 = arith.select %21, %13, %24 : vector<32x128xi1>, vector<32x128xf32>
    %cst_15 = arith.constant dense<0xFF800000> : vector<32xf32>
    %29 = vector.multi_reduction <maximumf>, %28, %cst_15 [1] : vector<32x128xf32> to vector<32xf32>
    %30 = vector.shape_cast %29 : vector<32xf32> to vector<32x1xf32>
    %31 = vector.shape_cast %27 : vector<32x1xf32> to vector<32x1xf32>
    %32 = vector.broadcast %31 : vector<32x1xf32> to vector<32x128xf32>
    %33 = vector.shape_cast %30 : vector<32x1xf32> to vector<32x1xf32>
    %34 = vector.broadcast %33 : vector<32x1xf32> to vector<32x128xf32>
    %35 = arith.select %16, %32, %34 : vector<32x128xi1>, vector<32x128xf32>
    %36 = arith.subf %13, %35 : vector<32x128xf32>
    %37 = math.exp %36 : vector<32x128xf32>
    %cst_16 = arith.constant 0.000000e+00 : f32
    %38 = vector.broadcast %cst_16 : f32 to vector<32x128xf32>
    %39 = arith.select %23, %37, %38 : vector<32x128xi1>, vector<32x128xf32>
    %cst_17 = arith.constant 0.000000e+00 : f32
    %40 = vector.broadcast %cst_17 : f32 to vector<32x128xf32>
    %41 = arith.select %16, %39, %40 : vector<32x128xi1>, vector<32x128xf32>
    %cst_18 = arith.constant dense<0.000000e+00> : vector<32xf32>
    %42 = vector.multi_reduction <add>, %41, %cst_18 [1] : vector<32x128xf32> to vector<32xf32>
    %43 = vector.shape_cast %42 : vector<32xf32> to vector<32x1xf32>
    %cst_19 = arith.constant 0.000000e+00 : f32
    %44 = vector.broadcast %cst_19 : f32 to vector<32x128xf32>
    %45 = arith.select %21, %39, %44 : vector<32x128xi1>, vector<32x128xf32>
    %cst_20 = arith.constant dense<0.000000e+00> : vector<32xf32>
    %46 = vector.multi_reduction <add>, %45, %cst_20 [1] : vector<32x128xf32> to vector<32xf32>
    %47 = vector.shape_cast %46 : vector<32xf32> to vector<32x1xf32>
    %cst_21 = arith.constant 1.000000e+00 : f32
    %48 = vector.broadcast %cst_21 : f32 to vector<32x1xf32>
    %49 = arith.divf %48, %43 : vector<32x1xf32>
    %cst_22 = arith.constant 1.000000e+00 : f32
    %50 = vector.broadcast %cst_22 : f32 to vector<32x1xf32>
    %51 = arith.divf %50, %47 : vector<32x1xf32>
    %52 = vector.shape_cast %49 : vector<32x1xf32> to vector<32x1xf32>
    %53 = vector.broadcast %52 : vector<32x1xf32> to vector<32x128xf32>
    %54 = vector.shape_cast %51 : vector<32x1xf32> to vector<32x1xf32>
    %55 = vector.broadcast %54 : vector<32x1xf32> to vector<32x128xf32>
    %56 = arith.select %16, %53, %55 : vector<32x128xi1>, vector<32x128xf32>
    %57 = arith.mulf %39, %56 : vector<32x128xf32>
    %c0_23 = arith.constant 0 : index
    %c0_24 = arith.constant 0 : index
    %58 = vector.load %arg6[%c0_23, %c0_24] : memref<32x128xf32, #tpu.memory_space<vmem>>, vector<32x128xf32>
    tpu.vector_store %arg6[%c0_23, %c0_24], %57 {strides = array<i32>} : memref<32x128xf32, #tpu.memory_space<vmem>>, vector<32x128xf32>,
    return
  }
  func.func @transform_0(%arg0: i32) -> (i32, i32) {
    %c0_i32 = arith.constant 0 : i32
    %c0_i32_0 = arith.constant 0 : i32
    return %arg0, %c0_i32 : i32, i32
  }
  func.func @transform_1(%arg0: i32) -> (i32, i32) {
    %c0_i32 = arith.constant 0 : i32
    %c0_i32_0 = arith.constant 0 : i32
    %c0_i32_1 = arith.constant 0 : i32
    return %c0_i32, %c0_i32_0 : i32, i32
  }
  func.func @transform_2(%arg0: i32) -> (i32, i32) {
    %c0_i32 = arith.constant 0 : i32
    %c0_i32_0 = arith.constant 0 : i32
    %c0_i32_1 = arith.constant 0 : i32
    return %c0_i32, %c0_i32_0 : i32, i32
  }
  func.func @transform_3(%arg0: i32) -> (i32, i32) {
    %c0_i32 = arith.constant 0 : i32
    %c0_i32_0 = arith.constant 0 : i32
    %c0_i32_1 = arith.constant 0 : i32
    return %c0_i32, %c0_i32_0 : i32, i32
  }
  func.func @transform_4(%arg0: i32) -> (i32, i32) {
    %c0_i32 = arith.constant 0 : i32
    %c0_i32_0 = arith.constant 0 : i32
    %c0_i32_1 = arith.constant 0 : i32
    return %c0_i32, %c0_i32_0 : i32, i32
  }
  func.func @transform_5(%arg0: i32) -> (i32, i32) {
    %c0_i32 = arith.constant 0 : i32
    %c0_i32_0 = arith.constant 0 : i32
    return %arg0, %c0_i32 : i32, i32
  }
}

</mosaic_0001>

<llo_original>
// kernel: tpu_custom_call.1
$region0: #{tpu_custom_call.1}
  #allocation0 [shape = 'u32[]', space=smem, size = 0x4, offset = 0x4, fixed_abs, tag = 'smem constant byte address 0x4 - core index']
  #allocation1 [shape = 'u32[144,128]{1,0:T(1,128)}', space=vmem, size = 0x12000, scoped, tag = 'internal scratch']
  %s0 = inlined_call_operand.hbm [shape: bf16[64,128], index: 0, kind: input, shape index: {}]
  %s1 = inlined_call_operand.hbm [shape: bf16[128,256], index: 1, kind: input, shape index: {}]
  %s2 = inlined_call_operand.vmem [shape: f32[1,256], index: 2, kind: input, shape index: {}]
  %s3 = inlined_call_operand.hbm [shape: bf16[256,128], index: 3, kind: input, shape index: {}]
  %s4 = inlined_call_operand.vmem [shape: f32[1,128], index: 4, kind: input, shape index: {}]
  %s5 = inlined_call_operand.hbm [shape: f32[64,128], index: 5, kind: output, shape index: {}]
  %s6 = sld [smem:[#allocation0]]
  $region65: #{tpu_custom_call.1} parent=0
    _
  %s8 = ssub.s32 1, %s6
  %s9 = scalar_select 0, %s8, %s6
  $region1: #{tpu_custom_call.1} parent=0
    #allocation2 [shape = 'u8[16384]{0}', space=vmem, size = 0x4000, scoped, tag = 'input window, operand 0']
    #allocation3 [shape = 's32[2]{0}', space=sflag, size = 0x8, scoped, tag = 'scoped memory for tpu_custom_call.1']
    #allocation4 [shape = 's32[2]{0}', space=sflag, size = 0x8, scoped, tag = 'scoped memory for tpu_custom_call.1']
    #allocation5 [shape = 'u8[65536]{0}', space=vmem, size = 0x10000, scoped, tag = 'input window, operand 1, single buffered']
    #allocation6 [shape = 's32[1]{0}', space=sflag, size = 0x4, scoped, tag = 'scoped memory for tpu_custom_call.1']
    #allocation7 [shape = 'u8[65536]{0}', space=vmem, size = 0x10000, scoped, tag = 'input window, operand 3, single buffered']
    #allocation8 [shape = 'u8[32768]{0}', space=vmem, size = 0x8000, scoped, tag = 'output window, operand 0']
    %10 = vsyncpa [#allocation3], 0
    %s11 = scalar_lea.sflag [#allocation3], 1
    %12 = vsyncpa %s11, 0
    %13 = vsyncpa [#allocation6], 0
    %14 = vsyncpa [#allocation4], 0
    %s15 = scalar_lea.sflag [#allocation4], 1
    %16 = vsyncpa %s15, 0
    loop: start=0, step=1, limit=4
    $region2: #{tpu_custom_call.1} parent=1 // loop_pre_header
      _
    $region3: #{tpu_custom_call.1} parent=1 // loop_header
      %s18 = sphi 0, %s22
      %p19 = scmp.ge.s32.totalorder %s18, 4
      %s28 = sphi 0, %s30
      %s31 = sphi 0, %s28
      %s32 = sphi 0, %s31
      %s48 = sphi 0, %s32
      %s52 = sphi 0, %s52
      %s54 = sphi 0, %s52
      %s55 = sphi 0, %s54
      %s69 = sphi 0, %s55
      %s73 = sphi 0, %s73
      %s75 = sphi 0, %s73
      %s76 = sphi 0, %s75
      %s90 = sphi 0, %s76
      %s94 = sphi 0, %s94
      %s96 = sphi 0, %s94
      %s97 = sphi 0, %s96
      %s111 = sphi 0, %s97
      %s115 = sphi 0, %s115
      %s117 = sphi 0, %s115
      %s118 = sphi 0, %s117
      %s132 = sphi 0, %s118
      %s138 = sphi 0, %s140
      %s141 = sphi 0, %s138
      %s142 = sphi 0, %s141
      %s158 = sphi 0, %s142
    $region4: #{tpu_custom_call.1} parent=1 // loop_header_branch
      %21 = sbr.rel (%p19) target = $region8
    $region5: #{tpu_custom_call.1} parent=1 // loop_body
      %s23 = ssub.s32 %s18, 1
      %s24 = ssub.s32 %s18, 2
      %s25 = sadd.s32 %s18, 1
      %s26 = ssub.s32 %s18, %s25
      %p27 = scmp.eq.s32.totalorder %s26, 0
      %s29 = sadd.s32 %s28, 1
      %s30 = scalar_select %p27, %s28, %s29
      %p33 = pneg %p27
      %p34 = scmp.eq.s32.totalorder %s18, 1
      %p35 = por %p33, %p34
      %p36 = scmp.ne.s32.totalorder %s28, %s31
      %p37 = scmp.eq.s32.totalorder %s18, 0
      %p38 = por %p36, %p37
      %p39 = scmp.ne.s32.totalorder %s28, %s31
      %p40 = scmp.eq.s32.totalorder %s23, 1
      %p41 = por %p39, %p40
      %p42 = scmp.ne.s32.totalorder %s31, %s32
      %p43 = scmp.eq.s32.totalorder %s23, 0
      %p44 = por %p42, %p43
      %p45 = scmp.ne.s32.totalorder %s31, %s32
      %p46 = scmp.eq.s32.totalorder %s24, 1
      %p47 = por %p45, %p46
      %p49 = scmp.ne.s32.totalorder %s32, %s48
      %p50 = scmp.eq.s32.totalorder %s24, 0
      %p51 = por %p49, %p50
      %s53 = sadd.s32 %s52, 1
      %p56 = scmp.eq.s32.totalorder %s18, 1
      %p57 = scmp.ne.s32.totalorder %s52, %s54
      %p58 = scmp.eq.s32.totalorder %s18, 0
      %p59 = por %p57, %p58
      %p60 = scmp.ne.s32.totalorder %s52, %s54
      %p61 = scmp.eq.s32.totalorder %s23, 1
      %p62 = por %p60, %p61
      %p63 = scmp.ne.s32.totalorder %s54, %s55
      %p64 = scmp.eq.s32.totalorder %s23, 0
      %p65 = por %p63, %p64
      %p66 = scmp.ne.s32.totalorder %s54, %s55
      %p67 = scmp.eq.s32.totalorder %s24, 1
      %p68 = por %p66, %p67
      %p70 = scmp.ne.s32.totalorder %s55, %s69
      %p71 = scmp.eq.s32.totalorder %s24, 0
      %p72 = por %p70, %p71
      %s74 = sadd.s32 %s73, 1
      %p77 = scmp.eq.s32.totalorder %s18, 1
      %p78 = scmp.ne.s32.totalorder %s73, %s75
      %p79 = scmp.eq.s32.totalorder %s18, 0
      %p80 = por %p78, %p79
      %p81 = scmp.ne.s32.totalorder %s73, %s75
      %p82 = scmp.eq.s32.totalorder %s23, 1
      %p83 = por %p81, %p82
      %p84 = scmp.ne.s32.totalorder %s75, %s76
      %p85 = scmp.eq.s32.totalorder %s23, 0
      %p86 = por %p84, %p85
      %p87 = scmp.ne.s32.totalorder %s75, %s76
      %p88 = scmp.eq.s32.totalorder %s24, 1
      %p89 = por %p87, %p88
      %p91 = scmp.ne.s32.totalorder %s76, %s90
      %p92 = scmp.eq.s32.totalorder %s24, 0
      %p93 = por %p91, %p92
      %s95 = sadd.s32 %s94, 1
      %p98 = scmp.eq.s32.totalorder %s18, 1
      %p99 = scmp.ne.s32.totalorder %s94, %s96
      %p100 = scmp.eq.s32.totalorder %s18, 0
      %p101 = por %p99, %p100
      %p102 = scmp.ne.s32.totalorder %s94, %s96
      %p103 = scmp.eq.s32.totalorder %s23, 1
      %p104 = por %p102, %p103
      %p105 = scmp.ne.s32.totalorder %s96, %s97
      %p106 = scmp.eq.s32.totalorder %s23, 0
      %p107 = por %p105, %p106
      %p108 = scmp.ne.s32.totalorder %s96, %s97
      %p109 = scmp.eq.s32.totalorder %s24, 1
      %p110 = por %p108, %p109
      %p112 = scmp.ne.s32.totalorder %s97, %s111
      %p113 = scmp.eq.s32.totalorder %s24, 0
      %p114 = por %p112, %p113
      %s116 = sadd.s32 %s115, 1
      %p119 = scmp.eq.s32.totalorder %s18, 1
      %p120 = scmp.ne.s32.totalorder %s115, %s117
      %p121 = scmp.eq.s32.totalorder %s18, 0
      %p122 = por %p120, %p121
      %p123 = scmp.ne.s32.totalorder %s115, %s117
      %p124 = scmp.eq.s32.totalorder %s23, 1
      %p125 = por %p123, %p124
      %p126 = scmp.ne.s32.totalorder %s117, %s118
      %p127 = scmp.eq.s32.totalorder %s23, 0
      %p128 = por %p126, %p127
      %p129 = scmp.ne.s32.totalorder %s117, %s118
      %p130 = scmp.eq.s32.totalorder %s24, 1
      %p131 = por %p129, %p130
      %p133 = scmp.ne.s32.totalorder %s118, %s132
      %p134 = scmp.eq.s32.totalorder %s24, 0
      %p135 = por %p133, %p134
      %s136 = ssub.s32 %s18, %s25
      %p137 = scmp.eq.s32.totalorder %s136, 0
      %s139 = sadd.s32 %s138, 1
      %s140 = scalar_select %p137, %s138, %s139
      %p143 = pneg %p137
      %p144 = scmp.eq.s32.totalorder %s18, 1
      %p145 = por %p143, %p144
      %p146 = scmp.ne.s32.totalorder %s138, %s141
      %p147 = scmp.eq.s32.totalorder %s18, 0
      %p148 = por %p146, %p147
      %p149 = scmp.ne.s32.totalorder %s138, %s141
      %p150 = scmp.eq.s32.totalorder %s23, 1
      %p151 = por %p149, %p150
      %p152 = scmp.ne.s32.totalorder %s141, %s142
      %p153 = scmp.eq.s32.totalorder %s23, 0
      %p154 = por %p152, %p153
      %p155 = scmp.ne.s32.totalorder %s141, %s142
      %p156 = scmp.eq.s32.totalorder %s24, 1
      %p157 = por %p155, %p156
      %p159 = scmp.ne.s32.totalorder %s142, %s158
      %p160 = scmp.eq.s32.totalorder %s24, 0
      %p161 = por %p159, %p160
      %p162 = scmp.le.s32.totalorder 1, %s18
      %p163 = scmp.lt.s32.totalorder %s18, 3
      %p164 = pnand %p162, %p163
      %p165 = pneg %p164
      // Predicated region
      $region9: #{tpu_custom_call.1} parent=5 // pred_check
        _
      $region10: #{tpu_custom_call.1} parent=5 // pred_check_branch
        %167 = sbr.rel (%p164) target = $region12
      $region11: #{tpu_custom_call.1} parent=5 // pred_region
        %s168 = ssub.s32 %s18, 1
        // Predicated region
        $region13: #{tpu_custom_call.1} parent=11 // pred_check
          %p169 = pneg %p65
        $region14: #{tpu_custom_call.1} parent=11 // pred_check_branch
          %171 = sbr.rel (%p169) target = $region16
        $region15: #{tpu_custom_call.1} parent=11 // pred_region
          %s173 = ssub.s32 2048, 2048
          %174 = vsyncadd [#allocation6], %s173
          %s175 = sshll.u32 [#allocation5], 4
          %s176 = int_to_ptr.vmem [resolvable:$true] %s175
          %181 = dma.hbm_to_vmem [thread:$0]  %s1, 2048, %s176, [#allocation6], 128, 128, 8
        $region16: #{tpu_custom_call.1} parent=11 // pred_fallthru
          _
        // Predicated region
        $region17: #{tpu_custom_call.1} parent=11 // pred_check
          %p182 = pneg %p86
        $region18: #{tpu_custom_call.1} parent=11 // pred_check_branch
          %184 = sbr.rel (%p182) target = $region20
        $region19: #{tpu_custom_call.1} parent=11 // pred_region
          _
        $region20: #{tpu_custom_call.1} parent=11 // pred_fallthru
          _
        // Predicated region
        $region21: #{tpu_custom_call.1} parent=11 // pred_check
          %p185 = pneg %p107
        $region22: #{tpu_custom_call.1} parent=11 // pred_check_branch
          %187 = sbr.rel (%p185) target = $region24
        $region23: #{tpu_custom_call.1} parent=11 // pred_region
          %s189 = ssub.s32 2048, 2048
          %190 = vsyncadd [#allocation6], %s189
          %s191 = sshll.u32 [#allocation7], 4
          %s192 = int_to_ptr.vmem [resolvable:$true] %s191
          %197 = dma.hbm_to_vmem [thread:$0]  %s3, 2048, %s192, [#allocation6], 64, 64, 4
        $region24: #{tpu_custom_call.1} parent=11 // pred_fallthru
          _
        // Predicated region
        $region25: #{tpu_custom_call.1} parent=11 // pred_check
          %p198 = pneg %p128
        $region26: #{tpu_custom_call.1} parent=11 // pred_check_branch
          %200 = sbr.rel (%p198) target = $region28
        $region27: #{tpu_custom_call.1} parent=11 // pred_region
          _
        $region28: #{tpu_custom_call.1} parent=11 // pred_fallthru
          _
      $region12: #{tpu_custom_call.1} parent=5 // pred_fallthru
        _
      %p201 = scmp.lt.s32.totalorder %s18, 2
      // Predicated region
      $region29: #{tpu_custom_call.1} parent=5 // pred_check
        %p202 = pneg %p201
      $region30: #{tpu_custom_call.1} parent=5 // pred_check_branch
        %204 = sbr.rel (%p202) target = $region32
      $region31: #{tpu_custom_call.1} parent=5 // pred_region
        // Predicated region
        $region33: #{tpu_custom_call.1} parent=31 // pred_check
          %p205 = pneg %p38
        $region34: #{tpu_custom_call.1} parent=31 // pred_check_branch
          %207 = sbr.rel (%p205) target = $region36
        $region35: #{tpu_custom_call.1} parent=31 // pred_region
          %s208 = sand.u32 %s28, 1
          %s209 = scalar_lea.sflag [#allocation3], %s208
          %s210 = sand.u32 %s28, 1
          %s211 = smul.addr %s210, 16
          %s212 = scalar_lea.vmem [#allocation2], %s211
          %s213 = smul.u32 4, %s18
          %s215 = ssub.s32 256, 256
          %216 = vsyncadd %s209, %s215
          %s217 = smul.addr %s213, 64
          %s218 = scalar_lea.hbm %s0, %s217
          %s219 = sshll.u32 %s212, 4
          %s220 = int_to_ptr.vmem [resolvable:$true] %s219
          %225 = dma.hbm_to_vmem [thread:$0]  %s218, 256, %s220, %s209, 64, 64, 4
        $region36: #{tpu_custom_call.1} parent=31 // pred_fallthru
          _
      $region32: #{tpu_custom_call.1} parent=5 // pred_fallthru
        _
      %p226 = scmp.le.s32.totalorder 1, %s18
      %p227 = scmp.lt.s32.totalorder %s18, 3
      %p228 = pnand %p226, %p227
      %p229 = pneg %p228
      // Predicated region
      $region37: #{tpu_custom_call.1} parent=5 // pred_check
        _
      $region38: #{tpu_custom_call.1} parent=5 // pred_check_branch
        %231 = sbr.rel (%p228) target = $region40
      $region39: #{tpu_custom_call.1} parent=5 // pred_region
        %s232 = ssub.s32 %s18, 1
        %s233 = sand.u32 %s31, 1
        %s234 = scalar_lea.sflag [#allocation3], %s233
        %s235 = sand.u32 %s31, 1
        %s236 = smul.addr %s235, 16
        %s237 = scalar_lea.vmem [#allocation2], %s236
        // Predicated region
        $region41: #{tpu_custom_call.1} parent=39 // pred_check
          %p238 = pneg %p44
        $region42: #{tpu_custom_call.1} parent=39 // pred_check_branch
          %240 = sbr.rel (%p238) target = $region44
        $region43: #{tpu_custom_call.1} parent=39 // pred_region
          %241 = dma.done %s234, 256
        $region44: #{tpu_custom_call.1} parent=39 // pred_fallthru
          _
        // Predicated region
        $region45: #{tpu_custom_call.1} parent=39 // pred_check
          %p242 = pneg %p65
        $region46: #{tpu_custom_call.1} parent=39 // pred_check_branch
          %244 = sbr.rel (%p242) target = $region48
        $region47: #{tpu_custom_call.1} parent=39 // pred_region
          %245 = dma.done [#allocation6], 2048
        $region48: #{tpu_custom_call.1} parent=39 // pred_fallthru
          _
        // Predicated region
        $region49: #{tpu_custom_call.1} parent=39 // pred_check
          %p246 = pneg %p107
        $region50: #{tpu_custom_call.1} parent=39 // pred_check_branch
          %248 = sbr.rel (%p246) target = $region52
        $region51: #{tpu_custom_call.1} parent=39 // pred_region
          %249 = dma.done [#allocation6], 2048
        $region52: #{tpu_custom_call.1} parent=39 // pred_fallthru
          _
        %s250 = sand.u32 %s31, 1
        %s251 = scalar_lea.sflag [#allocation3], %s250
        %s252 = sand.u32 %s31, 1
        %s253 = smul.addr %s252, 16
        %s254 = scalar_lea.vmem [#allocation2], %s253
        %p255 = pneg %p44
        %p256 = pneg %p41
        %p257 = pneg %p65
        %p258 = pneg %p62
        %p259 = pneg %p86
        %p260 = pneg %p83
        %p261 = pneg %p107
        %p262 = pneg %p104
        %p263 = pneg %p128
        %p264 = pneg %p125
        %p265 = pneg %p154
        %p266 = pneg %p151
        %s267 = sand.u32 %s141, 1
        %s268 = scalar_lea.sflag [#allocation4], %s267
        %s269 = sand.u32 %s141, 1
        %s270 = smul.addr %s269, 32
        %s271 = scalar_lea.vmem [#allocation8], %s270
        %s272 = smul.u32 4, %s23
        %s273 = smul.u32 4, %s23
        %v275 = vld [vmem:[%s237] sm:$0xf]
        %v276 = vld [vmem:[%s237 + $0x4] sm:$0xf]
        %v277 = vld [vmem:[%s237 + $0x8] sm:$0xf]
        %v278 = vld [vmem:[%s237 + $0xc] sm:$0xf]
        %v279 = vld [vmem:[#allocation5] sm:$0xff]
        %v280 = vld [vmem:[#allocation5 + $0x8] sm:$0xff]
        %v281 = vld [vmem:[#allocation5 + $0x10] sm:$0xff]
        %v282 = vld [vmem:[#allocation5 + $0x18] sm:$0xff]
        %v283 = vld [vmem:[#allocation5 + $0x20] sm:$0xff]
        %v284 = vld [vmem:[#allocation5 + $0x28] sm:$0xff]
        %v285 = vld [vmem:[#allocation5 + $0x30] sm:$0xff]
        %v286 = vld [vmem:[#allocation5 + $0x38] sm:$0xff]
        %v287 = vld [vmem:[#allocation5 + $0x40] sm:$0xff]
        %v288 = vld [vmem:[#allocation5 + $0x48] sm:$0xff]
        %v289 = vld [vmem:[#allocation5 + $0x50] sm:$0xff]
        %v290 = vld [vmem:[#allocation5 + $0x58] sm:$0xff]
        %v291 = vld [vmem:[#allocation5 + $0x60] sm:$0xff]
        %v292 = vld [vmem:[#allocation5 + $0x68] sm:$0xff]
        %v293 = vld [vmem:[#allocation5 + $0x70] sm:$0xff]
        %v294 = vld [vmem:[#allocation5 + $0x78] sm:$0xff]
        %v295 = vld [vmem:[%s2] sm:$0x3]
        %v297 = vlaneseq
        %v298 = vshrl.u32 %v297, 7
        %v299 = vsub.s32 0, %v298
        %v300 = vrot.slane %v295, %v299
        %v301 = vlaneseq
        %v302 = vshrl.u32 %v301, 7
        %v303 = vsub.s32 1, %v302
        %v304 = vrot.slane %v295, %v303
        %v311 = vunpack.c.l.b16 %v275
        %v312 = vunpack.c.l.b16 %v276
        %v313 = vunpack.c.l.b16 %v277
        %v314 = vunpack.c.l.b16 %v278
        %v315 = vpack.c.b16 %v312, %v311
        %v316 = vpack.c.b16 %v314, %v313
        %v335 = vunpack.c.l.b16 %v279
        %v336 = vunpack.c.h.b16 %v279
        %v337 = vunpack.c.l.b16 %v280
        %v338 = vunpack.c.h.b16 %v280
        %v339 = vunpack.c.l.b16 %v281
        %v340 = vunpack.c.h.b16 %v281
        %v341 = vunpack.c.l.b16 %v282
        %v342 = vunpack.c.h.b16 %v282
        %v343 = vunpack.c.l.b16 %v283
        %v344 = vunpack.c.h.b16 %v283
        %v345 = vunpack.c.l.b16 %v284
        %v346 = vunpack.c.h.b16 %v284
        %v347 = vunpack.c.l.b16 %v285
        %v348 = vunpack.c.h.b16 %v285
        %v349 = vunpack.c.l.b16 %v286
        %v350 = vunpack.c.h.b16 %v286
        %v351 = vunpack.c.l.b16 %v287
        %v352 = vunpack.c.h.b16 %v287
        %v353 = vunpack.c.l.b16 %v288
        %v354 = vunpack.c.h.b16 %v288
        %v355 = vunpack.c.l.b16 %v289
        %v356 = vunpack.c.h.b16 %v289
        %v357 = vunpack.c.l.b16 %v290
        %v358 = vunpack.c.h.b16 %v290
        %v359 = vunpack.c.l.b16 %v291
        %v360 = vunpack.c.h.b16 %v291
        %v361 = vunpack.c.l.b16 %v292
        %v362 = vunpack.c.h.b16 %v292
        %v363 = vunpack.c.l.b16 %v293
        %v364 = vunpack.c.h.b16 %v293
        %v365 = vunpack.c.l.b16 %v294
        %v366 = vunpack.c.h.b16 %v294
        %v367 = vpack.c.b16 %v337, %v335
        %v368 = vpack.c.b16 %v338, %v336
        %v369 = vpack.c.b16 %v341, %v339
        %v370 = vpack.c.b16 %v342, %v340
        %v371 = vpack.c.b16 %v345, %v343
        %v372 = vpack.c.b16 %v346, %v344
        %v373 = vpack.c.b16 %v349, %v347
        %v374 = vpack.c.b16 %v350, %v348
        %v375 = vpack.c.b16 %v353, %v351
        %v376 = vpack.c.b16 %v354, %v352
        %v377 = vpack.c.b16 %v357, %v355
        %v378 = vpack.c.b16 %v358, %v356
        %v379 = vpack.c.b16 %v361, %v359
        %v380 = vpack.c.b16 %v362, %v360
        %v381 = vpack.c.b16 %v365, %v363
        %v382 = vpack.c.b16 %v366, %v364
        %399 = vmatprep.subr.bf16.mxu0 %v368
        %400 = vmatpush1.bf16.msra.mxu0 %v367
        %401 = vmatprep.subr.bf16.mxu0 %v370
        %402 = vmatpush1.bf16.msra.mxu0 %v369
        %403 = vmatprep.subr.bf16.mxu0 %v372
        %404 = vmatpush1.bf16.msra.mxu0 %v371
        %405 = vmatprep.subr.bf16.mxu0 %v374
        %406 = vmatpush1.bf16.msra.mxu0 %v373
        %407 = vmatprep.subr.bf16.mxu0 %v376
        %408 = vmatpush1.bf16.msra.mxu0 %v375
        %409 = vmatprep.subr.bf16.mxu0 %v378
        %410 = vmatpush1.bf16.msra.mxu0 %v377
        %411 = vmatprep.subr.bf16.mxu0 %v380
        %412 = vmatpush1.bf16.msra.mxu0 %v379
        %413 = vmatprep.subr.bf16.mxu0 %v382
        %414 = vmatpush1.bf16.msra.mxu0 %v381
        %415 = vmatprep.subr.bf16.mxu0 0
        %416 = vmatpush1.bf16.msra.mxu0 0
        %417 = vmatprep.subr.bf16.mxu0 0
        %418 = vmatpush1.bf16.msra.mxu0 0
        %419 = vmatprep.subr.bf16.mxu0 0
        %420 = vmatpush1.bf16.msra.mxu0 0
        %421 = vmatprep.subr.bf16.mxu0 0
        %422 = vmatpush1.bf16.msra.mxu0 0
        %423 = vmatprep.subr.bf16.mxu0 0
        %424 = vmatpush1.bf16.msra.mxu0 0
        %425 = vmatprep.subr.bf16.mxu0 0
        %426 = vmatpush1.bf16.msra.mxu0 0
        %427 = vmatprep.subr.bf16.mxu0 0
        %428 = vmatpush1.bf16.msra.mxu0 0
        %429 = vmatprep.subr.bf16.mxu0 0
        %430 = vmatpush1.bf16.msra.mxu0 0
        %431 = vmatprep.mubr.bf16.mxu0 0
        %432 = vmatmul.mubr.bf16.gmra.mrb[0].mxu0 %v315
        %v433 = vpop.f32.mrb[0].mxu0
        %v434 = vadd.f32 %v300, %v433
        %v435 = vpop.f32.mrb[0].mxu0
        %v436 = vadd.f32 %v304, %v435
        %v437 = vpop.f32.mrb[0].mxu0
        %v438 = vadd.f32 %v300, %v437
        %v439 = vpop.f32.mrb[0].mxu0
        %v440 = vadd.f32 %v304, %v439
        %441 = vmatprep.mubr.bf16.mxu0 0
        %442 = vmatmul.mubr.bf16.gmra.mrb[0].mxu0 %v316
        %v443 = vpop.f32.mrb[0].mxu0
        %v444 = vadd.f32 %v300, %v443
        %v445 = vpop.f32.mrb[0].mxu0
        %v446 = vadd.f32 %v304, %v445
        %v447 = vpop.f32.mrb[0].mxu0
        %v448 = vadd.f32 %v300, %v447
        %v449 = vpop.f32.mrb[0].mxu0
        %v450 = vadd.f32 %v304, %v449
        %451 = vdwg.mxu0
        %v452 = vmax.f32 %v434, 0.0
        %v453 = vmax.f32 %v436, 0.0
        %v454 = vmax.f32 %v438, 0.0
        %v455 = vmax.f32 %v440, 0.0
        %v456 = vmax.f32 %v444, 0.0
        %v457 = vmax.f32 %v446, 0.0
        %v458 = vmax.f32 %v448, 0.0
        %v459 = vmax.f32 %v450, 0.0
        %v460 = vpack.c.bf16 %v454, %v452
        %v461 = vpack.c.bf16 %v455, %v453
        %v462 = vpack.c.bf16 %v458, %v456
        %v463 = vpack.c.bf16 %v459, %v457
        %v464 = vld [vmem:[#allocation7] sm:$0xf]
        %v465 = vld [vmem:[#allocation7 + $0x4] sm:$0xf]
        %v466 = vld [vmem:[#allocation7 + $0x8] sm:$0xf]
        %v467 = vld [vmem:[#allocation7 + $0xc] sm:$0xf]
        %v468 = vld [vmem:[#allocation7 + $0x10] sm:$0xf]
        %v469 = vld [vmem:[#allocation7 + $0x14] sm:$0xf]
        %v470 = vld [vmem:[#allocation7 + $0x18] sm:$0xf]
        %v471 = vld [vmem:[#allocation7 + $0x1c] sm:$0xf]
        %v472 = vld [vmem:[#allocation7 + $0x20] sm:$0xf]
        %v473 = vld [vmem:[#allocation7 + $0x24] sm:$0xf]
        %v474 = vld [vmem:[#allocation7 + $0x28] sm:$0xf]
        %v475 = vld [vmem:[#allocation7 + $0x2c] sm:$0xf]
        %v476 = vld [vmem:[#allocation7 + $0x30] sm:$0xf]
        %v477 = vld [vmem:[#allocation7 + $0x34] sm:$0xf]
        %v478 = vld [vmem:[#allocation7 + $0x38] sm:$0xf]
        %v479 = vld [vmem:[#allocation7 + $0x3c] sm:$0xf]
        %v480 = vld [vmem:[#allocation7 + $0x40] sm:$0xf]
        %v481 = vld [vmem:[#allocation7 + $0x44] sm:$0xf]
        %v482 = vld [vmem:[#allocation7 + $0x48] sm:$0xf]
        %v483 = vld [vmem:[#allocation7 + $0x4c] sm:$0xf]
        %v484 = vld [vmem:[#allocation7 + $0x50] sm:$0xf]
        %v485 = vld [vmem:[#allocation7 + $0x54] sm:$0xf]
        %v486 = vld [vmem:[#allocation7 + $0x58] sm:$0xf]
        %v487 = vld [vmem:[#allocation7 + $0x5c] sm:$0xf]
        %v488 = vld [vmem:[#allocation7 + $0x60] sm:$0xf]
        %v489 = vld [vmem:[#allocation7 + $0x64] sm:$0xf]
        %v490 = vld [vmem:[#allocation7 + $0x68] sm:$0xf]
        %v491 = vld [vmem:[#allocation7 + $0x6c] sm:$0xf]
        %v492 = vld [vmem:[#allocation7 + $0x70] sm:$0xf]
        %v493 = vld [vmem:[#allocation7 + $0x74] sm:$0xf]
        %v494 = vld [vmem:[#allocation7 + $0x78] sm:$0xf]
        %v495 = vld [vmem:[#allocation7 + $0x7c] sm:$0xf]
        %v496 = vld [vmem:[%s4] sm:$0x1]
        %v498 = vlaneseq
        %v499 = vshrl.u32 %v498, 7
        %v500 = vsub.s32 0, %v499
        %v501 = vrot.slane %v496, %v500
        %v535 = vunpack.c.l.b16 %v464
        %v536 = vunpack.c.l.b16 %v465
        %v537 = vunpack.c.l.b16 %v466
        %v538 = vunpack.c.l.b16 %v467
        %v539 = vunpack.c.l.b16 %v468
        %v540 = vunpack.c.l.b16 %v469
        %v541 = vunpack.c.l.b16 %v470
        %v542 = vunpack.c.l.b16 %v471
        %v543 = vunpack.c.l.b16 %v472
        %v544 = vunpack.c.l.b16 %v473
        %v545 = vunpack.c.l.b16 %v474
        %v546 = vunpack.c.l.b16 %v475
        %v547 = vunpack.c.l.b16 %v476
        %v548 = vunpack.c.l.b16 %v477
        %v549 = vunpack.c.l.b16 %v478
        %v550 = vunpack.c.l.b16 %v479
        %v551 = vunpack.c.l.b16 %v480
        %v552 = vunpack.c.l.b16 %v481
        %v553 = vunpack.c.l.b16 %v482
        %v554 = vunpack.c.l.b16 %v483
        %v555 = vunpack.c.l.b16 %v484
        %v556 = vunpack.c.l.b16 %v485
        %v557 = vunpack.c.l.b16 %v486
        %v558 = vunpack.c.l.b16 %v487
        %v559 = vunpack.c.l.b16 %v488
        %v560 = vunpack.c.l.b16 %v489
        %v561 = vunpack.c.l.b16 %v490
        %v562 = vunpack.c.l.b16 %v491
        %v563 = vunpack.c.l.b16 %v492
        %v564 = vunpack.c.l.b16 %v493
        %v565 = vunpack.c.l.b16 %v494
        %v566 = vunpack.c.l.b16 %v495
        %v567 = vpack.c.b16 %v536, %v535
        %v568 = vpack.c.b16 %v538, %v537
        %v569 = vpack.c.b16 %v540, %v539
        %v570 = vpack.c.b16 %v542, %v541
        %v571 = vpack.c.b16 %v544, %v543
        %v572 = vpack.c.b16 %v546, %v545
        %v573 = vpack.c.b16 %v548, %v547
        %v574 = vpack.c.b16 %v550, %v549
        %v575 = vpack.c.b16 %v552, %v551
        %v576 = vpack.c.b16 %v554, %v553
        %v577 = vpack.c.b16 %v556, %v555
        %v578 = vpack.c.b16 %v558, %v557
        %v579 = vpack.c.b16 %v560, %v559
        %v580 = vpack.c.b16 %v562, %v561
        %v581 = vpack.c.b16 %v564, %v563
        %v582 = vpack.c.b16 %v566, %v565
        %599 = vmatprep.subr.bf16.mxu0 0
        %600 = vmatpush1.bf16.msra.mxu0 %v567
        %601 = vmatprep.subr.bf16.mxu0 0
        %602 = vmatpush1.bf16.msra.mxu0 %v568
        %603 = vmatprep.subr.bf16.mxu0 0
        %604 = vmatpush1.bf16.msra.mxu0 %v569
        %605 = vmatprep.subr.bf16.mxu0 0
        %606 = vmatpush1.bf16.msra.mxu0 %v570
        %607 = vmatprep.subr.bf16.mxu0 0
        %608 = vmatpush1.bf16.msra.mxu0 %v571
        %609 = vmatprep.subr.bf16.mxu0 0
        %610 = vmatpush1.bf16.msra.mxu0 %v572
        %611 = vmatprep.subr.bf16.mxu0 0
        %612 = vmatpush1.bf16.msra.mxu0 %v573
        %613 = vmatprep.subr.bf16.mxu0 0
        %614 = vmatpush1.bf16.msra.mxu0 %v574
        %615 = vmatprep.subr.bf16.mxu0 0
        %616 = vmatpush1.bf16.msra.mxu0 %v575
        %617 = vmatprep.subr.bf16.mxu0 0
        %618 = vmatpush1.bf16.msra.mxu0 %v576
        %619 = vmatprep.subr.bf16.mxu0 0
        %620 = vmatpush1.bf16.msra.mxu0 %v577
        %621 = vmatprep.subr.bf16.mxu0 0
        %622 = vmatpush1.bf16.msra.mxu0 %v578
        %623 = vmatprep.subr.bf16.mxu0 0
        %624 = vmatpush1.bf16.msra.mxu0 %v579
        %625 = vmatprep.subr.bf16.mxu0 0
        %626 = vmatpush1.bf16.msra.mxu0 %v580
        %627 = vmatprep.subr.bf16.mxu0 0
        %628 = vmatpush1.bf16.msra.mxu0 %v581
        %629 = vmatprep.subr.bf16.mxu0 0
        %630 = vmatpush1.bf16.msra.mxu0 %v582
        %631 = vmatprep.mubr.bf16.mxu0 %v461
        %632 = vmatmul.mubr.bf16.gmra.mrb[0].mxu0 %v460
        %v633 = vpop.f32.mrb[0].mxu0
        %v634 = vadd.f32 %v501, %v633
        %v635 = vpop.f32.mrb[0].mxu0
        %v636 = vpop.f32.mrb[0].mxu0
        %v637 = vadd.f32 %v501, %v636
        %v638 = vpop.f32.mrb[0].mxu0
        %639 = vmatprep.mubr.bf16.mxu0 %v463
        %640 = vmatmul.mubr.bf16.gmra.mrb[0].mxu0 %v462
        %v641 = vpop.f32.mrb[0].mxu0
        %v642 = vadd.f32 %v501, %v641
        %v643 = vpop.f32.mrb[0].mxu0
        %v644 = vpop.f32.mrb[0].mxu0
        %v645 = vadd.f32 %v501, %v644
        %v646 = vpop.f32.mrb[0].mxu0
        %647 = vdwg.mxu0
        %v648 = vlaneseq
        %v649 = vand.u32 %v648, 127
        %vm650 = vcmp.lt.s32.totalorder %v649, 5
        %vm651 = vcmp.ge.s32.totalorder %v649, 5
        %vm652 = vcmp.lt.s32.totalorder %v649, 12
        %vm653 = vmand %vm651, %vm652
        %v654 = vsel %vm650, %v634, -inf
        %v655 = vsel %vm650, %v637, -inf
        %v656 = vsel %vm650, %v642, -inf
        %v657 = vsel %vm650, %v645, -inf
        %658 = vmax.xlane.f32.xlu0 %v654
        %v659 = vpop.xlane.xlu0 %658
        %660 = vmax.xlane.f32.xlu0 %v655
        %v661 = vpop.xlane.xlu0 %660
        %662 = vmax.xlane.f32.xlu0 %v656
        %v663 = vpop.xlane.xlu0 %662
        %664 = vmax.xlane.f32.xlu0 %v657
        %v665 = vpop.xlane.xlu0 %664
        %v666 = vsel %vm653, %v634, -inf
        %v667 = vsel %vm653, %v637, -inf
        %v668 = vsel %vm653, %v642, -inf
        %v669 = vsel %vm653, %v645, -inf
        %670 = vmax.xlane.f32.xlu0 %v666
        %v671 = vpop.xlane.xlu0 %670
        %672 = vmax.xlane.f32.xlu0 %v667
        %v673 = vpop.xlane.xlu0 %672
        %674 = vmax.xlane.f32.xlu0 %v668
        %v675 = vpop.xlane.xlu0 %674
        %676 = vmax.xlane.f32.xlu0 %v669
        %v677 = vpop.xlane.xlu0 %676
        %v678 = vsel %vm650, %v659, %v671
        %v679 = vsel %vm650, %v661, %v673
        %v680 = vsel %vm650, %v663, %v675
        %v681 = vsel %vm650, %v665, %v677
        %v682 = vsub.f32 %v634, %v678
        %v683 = vsub.f32 %v637, %v679
        %v684 = vsub.f32 %v642, %v680
        %v685 = vsub.f32 %v645, %v681
        %v686 = vmul.f32 %v682, 1.442695
        %v687 = vpow.pop %v686
        %v688 = vmul.f32 %v683, 1.442695
        %v689 = vpow.pop %v688
        %v690 = vmul.f32 %v684, 1.442695
        %v691 = vpow.pop %v690
        %v692 = vmul.f32 %v685, 1.442695
        %v693 = vpow.pop %v692
        %v694 = vsel %vm652, %v687, 0.0
        %v695 = vsel %vm652, %v689, 0.0
        %v696 = vsel %vm652, %v691, 0.0
        %v697 = vsel %vm652, %v693, 0.0
        %v698 = vsel %vm650, %v694, 0.0
        %v699 = vsel %vm650, %v695, 0.0
        %v700 = vsel %vm650, %v696, 0.0
        %v701 = vsel %vm650, %v697, 0.0
        %702 = vadd.xlane.f32.xlu0 %v698
        %v703 = vpop.xlane.xlu0 %702
        %704 = vadd.xlane.f32.xlu0 %v699
        %v705 = vpop.xlane.xlu0 %704
        %706 = vadd.xlane.f32.xlu0 %v700
        %v707 = vpop.xlane.xlu0 %706
        %708 = vadd.xlane.f32.xlu0 %v701
        %v709 = vpop.xlane.xlu0 %708
        %v710 = vsel %vm653, %v694, 0.0
        %v711 = vsel %vm653, %v695, 0.0
        %v712 = vsel %vm653, %v696, 0.0
        %v713 = vsel %vm653, %v697, 0.0
        %714 = vadd.xlane.f32.xlu0 %v710
        %v715 = vpop.xlane.xlu0 %714
        %716 = vadd.xlane.f32.xlu0 %v711
        %v717 = vpop.xlane.xlu0 %716
        %718 = vadd.xlane.f32.xlu0 %v712
        %v719 = vpop.xlane.xlu0 %718
        %720 = vadd.xlane.f32.xlu0 %v713
        %v721 = vpop.xlane.xlu0 %720
        %v722 = vrcp.pop %v703
        %v723 = vmul.f32 1.0, %v722
        %v724 = vrcp.pop %v705
        %v725 = vmul.f32 1.0, %v724
        %v726 = vrcp.pop %v707
        %v727 = vmul.f32 1.0, %v726
        %v728 = vrcp.pop %v709
        %v729 = vmul.f32 1.0, %v728
        %v730 = vrcp.pop %v715
        %v731 = vmul.f32 1.0, %v730
        %v732 = vrcp.pop %v717
        %v733 = vmul.f32 1.0, %v732
        %v734 = vrcp.pop %v719
        %v735 = vmul.f32 1.0, %v734
        %v736 = vrcp.pop %v721
        %v737 = vmul.f32 1.0, %v736
        %v738 = vsel %vm650, %v723, %v731
        %v739 = vsel %vm650, %v725, %v733
        %v740 = vsel %vm650, %v727, %v735
        %v741 = vsel %vm650, %v729, %v737
        %v742 = vmul.f32 %v694, %v738
        %v743 = vmul.f32 %v695, %v739
        %v744 = vmul.f32 %v696, %v740
        %v745 = vmul.f32 %v697, %v741
        %746 = vst [vmem:[%s271] sm:$0xff] %v742
        %747 = vst [vmem:[%s271 + $0x8] sm:$0xff] %v743
        %748 = vst [vmem:[%s271 + $0x10] sm:$0xff] %v744
        %749 = vst [vmem:[%s271 + $0x18] sm:$0xff] %v745
        %s750 = sand.u32 %s141, 1
        %s751 = scalar_lea.sflag [#allocation4], %s750
        %s752 = sand.u32 %s141, 1
        %s753 = smul.addr %s752, 32
        %s754 = scalar_lea.vmem [#allocation8], %s753
        // Predicated region
        $region53: #{tpu_custom_call.1} parent=39 // pred_check
          %p755 = pneg %p151
        $region54: #{tpu_custom_call.1} parent=39 // pred_check_branch
          %757 = sbr.rel (%p755) target = $region56
        $region55: #{tpu_custom_call.1} parent=39 // pred_region
          %s758 = smul.u32 4, %s23
          %s760 = ssub.s32 512, 512
          %761 = vsyncadd %s751, %s760
          %s762 = smul.addr %s758, 128
          %s763 = scalar_lea.hbm %s5, %s762
          %s764 = sshll.u32 %s754, 4
          %s765 = int_to_ptr.vmem [resolvable:$true] %s764
          %770 = dma.vmem_to_hbm [thread:$0]  %s765, 512, %s763, %s751, 128, 128, 8
        $region56: #{tpu_custom_call.1} parent=39 // pred_fallthru
          _
      $region40: #{tpu_custom_call.1} parent=5 // pred_fallthru
        _
      %p771 = scmp.le.s32.totalorder 2, %s18
      // Predicated region
      $region57: #{tpu_custom_call.1} parent=5 // pred_check
        %p772 = pneg %p771
      $region58: #{tpu_custom_call.1} parent=5 // pred_check_branch
        %774 = sbr.rel (%p772) target = $region60
      $region59: #{tpu_custom_call.1} parent=5 // pred_region
        %s775 = ssub.s32 %s18, 2
        // Predicated region
        $region61: #{tpu_custom_call.1} parent=59 // pred_check
          %p776 = pneg %p157
        $region62: #{tpu_custom_call.1} parent=59 // pred_check_branch
          %778 = sbr.rel (%p776) target = $region64
        $region63: #{tpu_custom_call.1} parent=59 // pred_region
          %s779 = sand.u32 %s142, 1
          %s780 = scalar_lea.sflag [#allocation4], %s779
          %s781 = sand.u32 %s142, 1
          %s782 = smul.addr %s781, 32
          %s783 = scalar_lea.vmem [#allocation8], %s782
          %784 = dma.done %s780, 512
        $region64: #{tpu_custom_call.1} parent=59 // pred_fallthru
          _
      $region60: #{tpu_custom_call.1} parent=5 // pred_fallthru
        _
    $region6: #{tpu_custom_call.1} parent=1 // loop_footer
      %s22 = sadd.s32 1, %s18
    $region7: #{tpu_custom_call.1} parent=1 // loop_footer_branch
      %17 = sbr.rel target = $region3
    $region8: #{tpu_custom_call.1} parent=1 // loop_exit
      _
    %785 = vsyncpa [#allocation3], 1
    %s786 = scalar_lea.sflag [#allocation3], 1
    %787 = vsyncpa %s786, 1
    %788 = vsyncpa [#allocation6], 1
    %789 = vsyncpa [#allocation4], 1
    %s790 = scalar_lea.sflag [#allocation4], 1
    %791 = vsyncpa %s790, 1

</llo_original>
